<compile_context>
chip_gen: v7x
topology: tpu7x:2x2x1
jax: 0.10.0
libtpu: 0.0.40
codegen_flags: <defaults>
</compile_context>

<pallas_src>
import functools
import math

import jax
import jax.numpy as jnp
from jax.experimental import pallas as pl
from jax.experimental.pallas import tpu as pltpu


# ------------------------------ tiling helpers ------------------------------

def _round_down8(v):
    return max(8, (v // 8) * 8)


def _round_up(v, m):
    return ((v + m - 1) // m) * m


def _default_vmem_limit():
    # v5e/v6e have 128 MiB VMEM per core -> use up to 96 MiB; v7x has only
    # 64 MiB -> stay at 48 MiB (also the safe default for unknown chips).
    try:
        kind = jax.devices()[0].device_kind.lower()
    except Exception:
        kind = ""
    if "v5" in kind or "v6" in kind:
        return 96 * 1024 * 1024
    return 48 * 1024 * 1024


def _default_row_tile(n, d_in, hf_pad, vmem_limit):
    if n <= 8:
        return n
    # Kernel A per-row bytes: x tile (bf16 x2 buffers) + feat out (bf16 x2)
    # + logits out (f32 x2) + slack.
    per_row = 4 * d_in + 4 * hf_pad + 8 * 128 + 256
    rows = max(8, (vmem_limit // 2) // per_row)
    return min(_round_down8(n), _round_down8(rows), 2048)


def _default_dst_tile(n, hf_pad, num_heads, vmem_limit):
    if n <= 8:
        return n
    # VMEM-resident arrays in kernel B: feat (bf16), el^T (f32), bias.
    resident = n * hf_pad * 2 + n * num_heads * 4 + hf_pad * 4
    # Per destination row: adj tile (bf16, double-buffered) + live f32 e/p
    # temporaries + bf16 p cast + bool mask (~16 B / element), plus the
    # double-buffered f32 output tile and er.
    per_row = 16 * n + 8 * hf_pad + 8 * num_heads + 64
    avail = max(vmem_limit - resident - (4 << 20), per_row * 8)
    tile = min(_round_down8(n), _round_down8(avail // per_row), 2048)
    # Keep >= 2 grid steps so the "parallel" dst axis can be split across the
    # two TensorCores of a v7x megacore.
    if tile >= n:
        tile = max(8, _round_down8((n + 1) // 2))
    return tile


# ------------------------------ Pallas kernels ------------------------------

def _gat_proj_kernel(x_ref, w_ref, sel_ref, feat_ref, logit_ref):
    # Projection for all heads at once (bf16 MXU matmul, f32 accumulation);
    # hf is zero-padded to a multiple of 128 -> lane-dense unmasked store.
    feat = jnp.dot(x_ref[...], w_ref[...], preferred_element_type=jnp.float32)
    feat_ref[...] = feat.astype(jnp.bfloat16)
    # One fused matmul produces [el | er | 0-padding] as a 128-lane slab:
    # sel[:, h] / sel[:, H+h] are block-diagonal embeddings of attn_l / attn_r.
    logit_ref[...] = jnp.dot(feat, sel_ref[...],
                             preferred_element_type=jnp.float32)


def _gat_attn_kernel(adj_ref, feat_ref, elt_ref, er_ref, b_ref, out_ref, *,
                     num_heads, out_feats, hf, hf_pad, negative_slope,
                     apply_elu):
    # Edge mask computed ONCE per destination tile as a bool (shared by all
    # heads); fused into the leaky-relu select below (no f32 bias temporary).
    edge = adj_ref[...] > 0
    neg_inf = jnp.float32(-1e30)

    parts = []
    for h in range(num_heads):                          # static, small
        lo = h * out_feats
        el_row = elt_ref[h:h + 1, :]                    # (1, N_src), src on lanes
        er_col = er_ref[:, h:h + 1]                     # (T_dst, 1)
        e = el_row + er_col                             # (T_dst, N_src)
        e = jnp.where(e >= 0, e, negative_slope * e)    # leaky relu
        e = jnp.where(edge, e, neg_inf)                 # non-edges -> -1e30

        # Edge softmax over incoming edges (src axis = lanes). Normalization
        # happens AFTER the aggregation matmul (T*F mults instead of N^2).
        m = jnp.max(e, axis=-1, keepdims=True)
        p = jnp.exp(e - m)                              # in [0, 1]
        inv_denom = pl.reciprocal(jnp.sum(p, axis=-1, keepdims=True),
                                  approx=True)          # EUP (near free)

        agg = jnp.dot(p.astype(jnp.bfloat16),
                      feat_ref[:, lo:lo + out_feats],
                      preferred_element_type=jnp.float32)
        parts.append(agg * inv_denom)

    out = jnp.concatenate(parts, axis=-1)               # (T_dst, hf)
    if hf_pad > hf:                                     # keep store lane-dense
        out = jnp.concatenate(
            [out, jnp.zeros((out.shape[0], hf_pad - hf), jnp.float32)],
            axis=-1)
    out = out + b_ref[...]
    if apply_elu:
        out = jnp.where(out > 0, out, jnp.exp(out) - 1.0)   # ELU (0 stays 0)
    out_ref[...] = out                                  # single unmasked store


# -------------------------------- layer wrapper -----------------------------

def gat_layer_pallas(x, w_t, attn_l, attn_r, bias, adj_bf16, *, num_heads,
                     out_feats, negative_slope, apply_elu,
                     tile_row=None, tile_dst=None, vmem_limit=None):
    n, d_x = x.shape
    d_w, hf = w_t.shape
    assert hf == num_heads * out_feats
    hf_pad = _round_up(hf, 128)
    sel_pad = _round_up(2 * num_heads, 128)
    vmem_limit = vmem_limit or _default_vmem_limit()
    tile_row = tile_row or _default_row_tile(n, d_x, hf_pad, vmem_limit)
    tile_dst = tile_dst or _default_dst_tile(n, hf_pad, num_heads, vmem_limit)

    # bf16 inputs for the MXU matmuls (f32 accumulation inside the kernels).
    x_bf = x.astype(jnp.bfloat16)
    # Zero-pad W rows to the (possibly lane-padded) input width and columns to
    # a multiple of 128 so feat / out stores are lane-dense; padding stays 0
    # through every layer (ELU(0)=0, bias padding 0, zero W rows).
    w_pad = jnp.zeros((d_x, hf_pad), jnp.float32).at[:d_w, :hf].set(w_t)
    w_bf = w_pad.astype(jnp.bfloat16)
    b_pad = jnp.zeros((1, hf_pad), jnp.float32).at[:, :hf].set(
        bias.reshape(1, hf))

    # Fused block-diagonal selector: sel[h*F + f, h] = attn_l[h, f] and
    # sel[h*F + f, H + h] = attn_r[h, f]; padded to 128 lanes.
    eye_h = jnp.eye(num_heads, dtype=jnp.float32)
    sel_l = (attn_l[:, :, None] * eye_h[:, None, :]).reshape(hf, num_heads)
    sel_r = (attn_r[:, :, None] * eye_h[:, None, :]).reshape(hf, num_heads)
    sel = jnp.zeros((hf_pad, sel_pad), jnp.float32)
    sel = sel.at[:hf, :num_heads].set(sel_l)
    sel = sel.at[:hf, num_heads:2 * num_heads].set(sel_r)

    # ---- Kernel A: projection + attention logits (tiled over node rows) ----
    feat_bf, logit = pl.pallas_call(
        _gat_proj_kernel,
        grid=(pl.cdiv(n, tile_row),),
        in_specs=[
            pl.BlockSpec((tile_row, d_x), lambda i: (i, 0)),
            pl.BlockSpec((d_x, hf_pad), lambda i: (0, 0)),
            pl.BlockSpec((hf_pad, sel_pad), lambda i: (0, 0)),
        ],
        out_specs=[
            pl.BlockSpec((tile_row, hf_pad), lambda i: (i, 0)),
            pl.BlockSpec((tile_row, sel_pad), lambda i: (i, 0)),
        ],
        out_shape=[
            jax.ShapeDtypeStruct((n, hf_pad), jnp.bfloat16),
            jax.ShapeDtypeStruct((n, sel_pad), jnp.float32),
        ],
        compiler_params=pltpu.CompilerParams(
            dimension_semantics=("parallel",),
            vmem_limit_bytes=vmem_limit),
    )(x_bf, w_bf, sel)

    # Tiny layout plumbing in JAX: el with src on lanes, er dst-indexed.
    el_t = logit[:, :num_heads].T                 # (H, N)
    er = logit[:, num_heads:2 * num_heads]        # (N, H)

    # ---- Kernel B: edge softmax + aggregation (tiled over dst rows) --------
    cost = pl.CostEstimate(
        flops=2 * num_heads * n * n * out_feats + 6 * num_heads * n * n,
        transcendentals=num_heads * n * n,
        bytes_accessed=n * n * 2 + n * hf_pad * (2 + 4) + 8 * n * num_heads,
    )
    kernel_b = functools.partial(
        _gat_attn_kernel, num_heads=num_heads, out_feats=out_feats,
        hf=hf, hf_pad=hf_pad, negative_slope=negative_slope,
        apply_elu=apply_elu)
    out = pl.pallas_call(
        kernel_b,
        grid=(pl.cdiv(n, tile_dst),),
        in_specs=[
            pl.BlockSpec((tile_dst, n), lambda i: (i, 0)),          # adj (streamed)
            pl.BlockSpec((n, hf_pad), lambda i: (0, 0)),            # feat (resident)
            pl.BlockSpec((num_heads, n), lambda i: (0, 0)),         # el^T (resident)
            pl.BlockSpec((tile_dst, num_heads), lambda i: (i, 0)),  # er
            pl.BlockSpec((1, hf_pad), lambda i: (0, 0)),            # bias
        ],
        out_specs=pl.BlockSpec((tile_dst, hf_pad), lambda i: (i, 0)),
        out_shape=jax.ShapeDtypeStruct((n, hf_pad), jnp.float32),
        compiler_params=pltpu.CompilerParams(
            dimension_semantics=("parallel",),
            vmem_limit_bytes=vmem_limit),
        cost_estimate=cost,
    )(adj_bf16, feat_bf, el_t, er, b_pad)
    return out                                     # (N, hf_pad), padding = 0


# ------------------------------ model glue ----------------------------------

def init_gat_params(key, num_layers, in_dim, num_hidden, heads):
    """Deterministic xavier-normal-ish init matching reset_parameters shapes."""
    gain = math.sqrt(2.0)  # calculate_gain('relu')
    params = []
    d_in = in_dim
    for l in range(num_layers):
        h = heads[l]
        key, k1, k2, k3 = jax.random.split(key, 4)
        std_w = gain * math.sqrt(2.0 / (d_in + num_hidden * h))
        w_t = std_w * jax.random.normal(k1, (d_in, h * num_hidden), jnp.float32)
        std_a = gain * math.sqrt(2.0 / (h * num_hidden + num_hidden))
        attn_l = std_a * jax.random.normal(k2, (h, num_hidden), jnp.float32)
        attn_r = std_a * jax.random.normal(k3, (h, num_hidden), jnp.float32)
        bias = jnp.zeros((1, h * num_hidden), jnp.float32)  # constant_(bias, 0)
        params.append((w_t, attn_l, attn_r, bias))
        d_in = h * num_hidden
    return params


def gat_forward(x, adj, params, num_hidden, heads, negative_slope=0.2,
                tile_row=None, tile_dst=None):
    num_layers = len(params)
    # 0/1 adjacency is exact in bf16; halves the O(N^2) HBM/VMEM traffic vs f32.
    adj_bf = adj.astype(jnp.bfloat16)
    vmem_limit = _default_vmem_limit()
    h = x
    for l in range(num_layers):
        w_t, al, ar, b = params[l]
        h = gat_layer_pallas(h, w_t, al, ar, b, adj_bf,
                             num_heads=heads[l], out_feats=num_hidden,
                             negative_slope=negative_slope,
                             apply_elu=(l < num_layers - 1),
                             tile_row=tile_row, tile_dst=tile_dst,
                             vmem_limit=vmem_limit)
        # .flatten(1) between layers is a no-op: layer returns (N, hf_pad) with
        # zero lane padding that the next layer's zero-padded W rows ignore.
    n = h.shape[0]
    hf_last = heads[-1] * num_hidden
    h = h[:, :hf_last]                                           # drop padding
    return h.reshape(n, heads[-1], num_hidden).mean(axis=1)      # .mean(1)


# --------------------------- pure-JAX reference -----------------------------

def _bf16_round(v):
    return v.astype(jnp.bfloat16).astype(jnp.float32)


def _gat_layer_ref(x, w_t, al, ar, b, adj, num_heads, out_feats, slope,
                   apply_elu):
    n = x.shape[0]
    feat = _bf16_round(x) @ _bf16_round(w_t)        # mirrors bf16-in / f32-acc
    featr = feat.reshape(n, num_heads, out_feats)
    el = jnp.sum(featr * al[None], axis=-1)         # (N, H)
    er = jnp.sum(featr * ar[None], axis=-1)         # (N, H)
    e = el[None, :, :] + er[:, None, :]             # (Ndst, Nsrc, H)
    e = jnp.where(e >= 0, e, slope * e)
    e = jnp.where(adj[:, :, None] > 0, e, -1e30)
    p = jnp.exp(e - jnp.max(e, axis=1, keepdims=True))
    denom = jnp.sum(p, axis=1)                      # (Ndst, H)
    rst = jnp.einsum('vuh,uhf->vhf', _bf16_round(p),
                     _bf16_round(feat).reshape(n, num_heads, out_feats))
    rst = rst / denom[:, :, None]                   # normalize post-matmul
    rst = rst + b.reshape(1, num_heads, out_feats)
    if apply_elu:
        rst = jnp.where(rst > 0, rst, jnp.exp(rst) - 1.0)
    return rst.reshape(n, num_heads * out_feats)


def gat_forward_ref(x, adj, params, num_hidden, heads, negative_slope=0.2):
    num_layers = len(params)
    h = x
    for l in range(num_layers):
        w_t, al, ar, b = params[l]
        h = _gat_layer_ref(h, w_t, al, ar, b, adj, heads[l], num_hidden,
                           negative_slope, l < num_layers - 1)
    n = h.shape[0]
    return h.reshape(n, heads[-1], num_hidden).mean(axis=1)


# --------------------------------- main --------------------------------------

if __name__ == "__main__":
    key = jax.random.PRNGKey(0)
    n_nodes, in_dim, num_hidden = 16, 8, 8
    heads = [2, 2]
    num_layers = 2

    key, kx, ka, kp = jax.random.split(key, 4)
    x = jax.random.normal(kx, (n_nodes, in_dim), jnp.float32)

    # Deterministic random graph with self-loops (no zero-in-degree nodes).
    adj = (jax.random.uniform(ka, (n_nodes, n_nodes)) < 0.3).astype(jnp.float32)
    adj = jnp.clip(adj + jnp.eye(n_nodes, dtype=jnp.float32), 0.0, 1.0)

    params = init_gat_params(kp, num_layers, in_dim, num_hidden, heads)

    # Small tiles so the toy problem still exercises multi-step, parallel grids.
    logits = gat_forward(x, adj, params, num_hidden, heads,
                         tile_row=8, tile_dst=8)
    jax.block_until_ready(logits)

    ref = gat_forward_ref(x, adj, params, num_hidden, heads)
    assert logits.shape == (n_nodes, num_hidden)
    # bf16 MXU inputs + approximate EUP reciprocal -> allow ~1e-2 deviation.
    assert jnp.allclose(logits, ref, rtol=2e-2, atol=2e-2), \
        f"max abs diff {jnp.max(jnp.abs(logits - ref))}"

    print("KERNEL_OK")
</pallas_src>

<mosaic_0001>
module attributes {stable_mosaic.version = 11 : i64} {
  func.func @_gat_proj_kernel(%arg0: i32, %arg1: memref<8x8xbf16, #tpu.memory_space<vmem>>, %arg2: memref<8x128xbf16, #tpu.memory_space<vmem>>, %arg3: memref<128x128xf32, #tpu.memory_space<vmem>>, %arg4: memref<8x128xbf16, #tpu.memory_space<vmem>>, %arg5: memref<8x128xf32, #tpu.memory_space<vmem>>) attributes {dimension_semantics = [#tpu.dimension_semantics<parallel>], iteration_bounds = array<i64: 2>, scalar_prefetch = 0 : i64, scratch_operands = 0 : i64, tpu.core_type = #tpu.core_type<tc>, window_params = [{transform_indices = @transform_0, window_bounds = array<i64: 8, 8>}, {pipeline_mode = #tpu.pipeline_mode<synchronous>, transform_indices = @transform_1, window_bounds = array<i64: 8, 128>}, {pipeline_mode = #tpu.pipeline_mode<synchronous>, transform_indices = @transform_2, window_bounds = array<i64: 128, 128>}, {transform_indices = @transform_3, window_bounds = array<i64: 8, 128>}, {transform_indices = @transform_4, window_bounds = array<i64: 8, 128>}]} {
    %c0 = arith.constant 0 : index
    %c0_0 = arith.constant 0 : index
    %0 = vector.load %arg1[%c0, %c0_0] : memref<8x8xbf16, #tpu.memory_space<vmem>>, vector<8x8xbf16>
    %c0_1 = arith.constant 0 : index
    %c0_2 = arith.constant 0 : index
    %1 = vector.load %arg2[%c0_1, %c0_2] : memref<8x128xbf16, #tpu.memory_space<vmem>>, vector<8x128xbf16>
    %cst = arith.constant dense<0.000000e+00> : vector<8x128xf32>
    %2 = tpu.matmul %0, %1, %cst {dimension_numbers = #tpu.dot_dimension_numbers<[1], [0], [0], [1], [0, 0, 1, 1], [], []>} : vector<8x8xbf16>, vector<8x128xbf16>, vector<8x128xf32> -> vector<8x128xf32>
    %3 = arith.truncf %2 : vector<8x128xf32> to vector<8x128xbf16>
    %c0_3 = arith.constant 0 : index
    %c0_4 = arith.constant 0 : index
    %4 = vector.load %arg4[%c0_3, %c0_4] : memref<8x128xbf16, #tpu.memory_space<vmem>>, vector<8x128xbf16>
    tpu.vector_store %arg4[%c0_3, %c0_4], %3 {strides = array<i32>} : memref<8x128xbf16, #tpu.memory_space<vmem>>, vector<8x128xbf16>,
    %c0_5 = arith.constant 0 : index
    %c0_6 = arith.constant 0 : index
    %5 = vector.load %arg3[%c0_5, %c0_6] : memref<128x128xf32, #tpu.memory_space<vmem>>, vector<128x128xf32>
    %cst_7 = arith.constant dense<0.000000e+00> : vector<8x128xf32>
    %6 = tpu.matmul %2, %5, %cst_7 {dimension_numbers = #tpu.dot_dimension_numbers<[1], [0], [0], [1], [0, 0, 1, 1], [], []>} : vector<8x128xf32>, vector<128x128xf32>, vector<8x128xf32> -> vector<8x128xf32>
    %c0_8 = arith.constant 0 : index
    %c0_9 = arith.constant 0 : index
    %7 = vector.load %arg5[%c0_8, %c0_9] : memref<8x128xf32, #tpu.memory_space<vmem>>, vector<8x128xf32>
    tpu.vector_store %arg5[%c0_8, %c0_9], %6 {strides = array<i32>} : memref<8x128xf32, #tpu.memory_space<vmem>>, vector<8x128xf32>,
    return
  }
  func.func @transform_0(%arg0: i32) -> (i32, i32) {
    %c0_i32 = arith.constant 0 : i32
    %c0_i32_0 = arith.constant 0 : i32
    return %arg0, %c0_i32 : i32, i32
  }
  func.func @transform_1(%arg0: i32) -> (i32, i32) {
    %c0_i32 = arith.constant 0 : i32
    %c0_i32_0 = arith.constant 0 : i32
    %c0_i32_1 = arith.constant 0 : i32
    return %c0_i32, %c0_i32_0 : i32, i32
  }
  func.func @transform_2(%arg0: i32) -> (i32, i32) {
    %c0_i32 = arith.constant 0 : i32
    %c0_i32_0 = arith.constant 0 : i32
    %c0_i32_1 = arith.constant 0 : i32
    return %c0_i32, %c0_i32_0 : i32, i32
  }
  func.func @transform_3(%arg0: i32) -> (i32, i32) {
    %c0_i32 = arith.constant 0 : i32
    %c0_i32_0 = arith.constant 0 : i32
    return %arg0, %c0_i32 : i32, i32
  }
  func.func @transform_4(%arg0: i32) -> (i32, i32) {
    %c0_i32 = arith.constant 0 : i32
    %c0_i32_0 = arith.constant 0 : i32
    return %arg0, %c0_i32 : i32, i32
  }
}

</mosaic_0001>

<llo_original>
// kernel: tpu_custom_call.1
$region0: #{tpu_custom_call.1}
  #allocation0 [shape = 'u32[]', space=smem, size = 0x4, offset = 0x4, fixed_abs, tag = 'smem constant byte address 0x4 - core index']
  #allocation1 [shape = 'u32[144,128]{1,0:T(1,128)}', space=vmem, size = 0x12000, scoped, tag = 'internal scratch']
  %s0 = inlined_call_operand.vmem [shape: bf16[16,8], index: 0, kind: input, shape index: {}]
  %s1 = inlined_call_operand.vmem [shape: bf16[8,128], index: 1, kind: input, shape index: {}]
  %s2 = inlined_call_operand.hbm [shape: f32[128,128], index: 2, kind: input, shape index: {}]
  %s3 = inlined_call_operand.hbm [shape: bf16[16,128], index: 3, kind: output, shape index: {0}]
  %s4 = inlined_call_operand.hbm [shape: f32[16,128], index: 4, kind: output, shape index: {1}]
  %5 = xla_tuple %s3, %s4
  %s6 = sld [smem:[#allocation0]]
  $region57: #{tpu_custom_call.1} parent=0
    _
  %s8 = ssub.s32 1, %s6
  %s9 = scalar_select 0, %s8, %s6
  $region1: #{tpu_custom_call.1} parent=0
    #allocation2 [shape = 'u8[65536]{0}', space=vmem, size = 0x10000, scoped, tag = 'input window, operand 2, single buffered']
    #allocation3 [shape = 's32[2]{0}', space=sflag, size = 0x8, scoped, tag = 'scoped memory for tpu_custom_call.1']
    #allocation4 [shape = 's32[2]{0}', space=sflag, size = 0x8, scoped, tag = 'scoped memory for tpu_custom_call.1']
    #allocation5 [shape = 'u8[4096]{0}', space=vmem, size = 0x1000, scoped, tag = 'output window, operand 0']
    #allocation6 [shape = 'u8[8192]{0}', space=vmem, size = 0x2000, scoped, tag = 'output window, operand 1']
    #allocation7 [shape = 's32[2]{0}', space=sflag, size = 0x8, scoped, tag = 'scoped memory for tpu_custom_call.1']
    %10 = vsyncpa [#allocation3], 0
    %11 = vsyncpa [#allocation4], 0
    %s12 = scalar_lea.sflag [#allocation4], 1
    %13 = vsyncpa %s12, 0
    %14 = vsyncpa [#allocation7], 0
    %s15 = scalar_lea.sflag [#allocation7], 1
    %16 = vsyncpa %s15, 0
    loop: start=0, step=1, limit=4
    $region2: #{tpu_custom_call.1} parent=1 // loop_pre_header
      _
    $region3: #{tpu_custom_call.1} parent=1 // loop_header
      %s18 = sphi 0, %s22
      %p19 = scmp.ge.s32.totalorder %s18, 4
      %s28 = sphi 0, %s30
      %s31 = sphi 0, %s28
      %s32 = sphi 0, %s31
      %s48 = sphi 0, %s32
      %s52 = sphi 0, %s52
      %s54 = sphi 0, %s52
      %s55 = sphi 0, %s54
      %s69 = sphi 0, %s55
      %s73 = sphi 0, %s73
      %s75 = sphi 0, %s73
      %s76 = sphi 0, %s75
      %s90 = sphi 0, %s76
      %s96 = sphi 0, %s98
      %s99 = sphi 0, %s96
      %s100 = sphi 0, %s99
      %s116 = sphi 0, %s100
      %s122 = sphi 0, %s124
      %s125 = sphi 0, %s122
      %s126 = sphi 0, %s125
      %s142 = sphi 0, %s126
    $region4: #{tpu_custom_call.1} parent=1 // loop_header_branch
      %21 = sbr.rel (%p19) target = $region8
    $region5: #{tpu_custom_call.1} parent=1 // loop_body
      %s23 = ssub.s32 %s18, 1
      %s24 = ssub.s32 %s18, 2
      %s25 = sadd.s32 %s18, 1
      %s26 = ssub.s32 %s18, %s25
      %p27 = scmp.eq.s32.totalorder %s26, 0
      %s29 = sadd.s32 %s28, 1
      %s30 = scalar_select %p27, %s28, %s29
      %p33 = pneg %p27
      %p34 = scmp.eq.s32.totalorder %s18, 1
      %p35 = por %p33, %p34
      %p36 = scmp.ne.s32.totalorder %s28, %s31
      %p37 = scmp.eq.s32.totalorder %s18, 0
      %p38 = por %p36, %p37
      %p39 = scmp.ne.s32.totalorder %s28, %s31
      %p40 = scmp.eq.s32.totalorder %s23, 1
      %p41 = por %p39, %p40
      %p42 = scmp.ne.s32.totalorder %s31, %s32
      %p43 = scmp.eq.s32.totalorder %s23, 0
      %p44 = por %p42, %p43
      %p45 = scmp.ne.s32.totalorder %s31, %s32
      %p46 = scmp.eq.s32.totalorder %s24, 1
      %p47 = por %p45, %p46
      %p49 = scmp.ne.s32.totalorder %s32, %s48
      %p50 = scmp.eq.s32.totalorder %s24, 0
      %p51 = por %p49, %p50
      %s53 = sadd.s32 %s52, 1
      %p56 = scmp.eq.s32.totalorder %s18, 1
      %p57 = scmp.ne.s32.totalorder %s52, %s54
      %p58 = scmp.eq.s32.totalorder %s18, 0
      %p59 = por %p57, %p58
      %p60 = scmp.ne.s32.totalorder %s52, %s54
      %p61 = scmp.eq.s32.totalorder %s23, 1
      %p62 = por %p60, %p61
      %p63 = scmp.ne.s32.totalorder %s54, %s55
      %p64 = scmp.eq.s32.totalorder %s23, 0
      %p65 = por %p63, %p64
      %p66 = scmp.ne.s32.totalorder %s54, %s55
      %p67 = scmp.eq.s32.totalorder %s24, 1
      %p68 = por %p66, %p67
      %p70 = scmp.ne.s32.totalorder %s55, %s69
      %p71 = scmp.eq.s32.totalorder %s24, 0
      %p72 = por %p70, %p71
      %s74 = sadd.s32 %s73, 1
      %p77 = scmp.eq.s32.totalorder %s18, 1
      %p78 = scmp.ne.s32.totalorder %s73, %s75
      %p79 = scmp.eq.s32.totalorder %s18, 0
      %p80 = por %p78, %p79
      %p81 = scmp.ne.s32.totalorder %s73, %s75
      %p82 = scmp.eq.s32.totalorder %s23, 1
      %p83 = por %p81, %p82
      %p84 = scmp.ne.s32.totalorder %s75, %s76
      %p85 = scmp.eq.s32.totalorder %s23, 0
      %p86 = por %p84, %p85
      %p87 = scmp.ne.s32.totalorder %s75, %s76
      %p88 = scmp.eq.s32.totalorder %s24, 1
      %p89 = por %p87, %p88
      %p91 = scmp.ne.s32.totalorder %s76, %s90
      %p92 = scmp.eq.s32.totalorder %s24, 0
      %p93 = por %p91, %p92
      %s94 = ssub.s32 %s18, %s25
      %p95 = scmp.eq.s32.totalorder %s94, 0
      %s97 = sadd.s32 %s96, 1
      %s98 = scalar_select %p95, %s96, %s97
      %p101 = pneg %p95
      %p102 = scmp.eq.s32.totalorder %s18, 1
      %p103 = por %p101, %p102
      %p104 = scmp.ne.s32.totalorder %s96, %s99
      %p105 = scmp.eq.s32.totalorder %s18, 0
      %p106 = por %p104, %p105
      %p107 = scmp.ne.s32.totalorder %s96, %s99
      %p108 = scmp.eq.s32.totalorder %s23, 1
      %p109 = por %p107, %p108
      %p110 = scmp.ne.s32.totalorder %s99, %s100
      %p111 = scmp.eq.s32.totalorder %s23, 0
      %p112 = por %p110, %p111
      %p113 = scmp.ne.s32.totalorder %s99, %s100
      %p114 = scmp.eq.s32.totalorder %s24, 1
      %p115 = por %p113, %p114
      %p117 = scmp.ne.s32.totalorder %s100, %s116
      %p118 = scmp.eq.s32.totalorder %s24, 0
      %p119 = por %p117, %p118
      %s120 = ssub.s32 %s18, %s25
      %p121 = scmp.eq.s32.totalorder %s120, 0
      %s123 = sadd.s32 %s122, 1
      %s124 = scalar_select %p121, %s122, %s123
      %p127 = pneg %p121
      %p128 = scmp.eq.s32.totalorder %s18, 1
      %p129 = por %p127, %p128
      %p130 = scmp.ne.s32.totalorder %s122, %s125
      %p131 = scmp.eq.s32.totalorder %s18, 0
      %p132 = por %p130, %p131
      %p133 = scmp.ne.s32.totalorder %s122, %s125
      %p134 = scmp.eq.s32.totalorder %s23, 1
      %p135 = por %p133, %p134
      %p136 = scmp.ne.s32.totalorder %s125, %s126
      %p137 = scmp.eq.s32.totalorder %s23, 0
      %p138 = por %p136, %p137
      %p139 = scmp.ne.s32.totalorder %s125, %s126
      %p140 = scmp.eq.s32.totalorder %s24, 1
      %p141 = por %p139, %p140
      %p143 = scmp.ne.s32.totalorder %s126, %s142
      %p144 = scmp.eq.s32.totalorder %s24, 0
      %p145 = por %p143, %p144
      %p146 = scmp.le.s32.totalorder 1, %s18
      %p147 = scmp.lt.s32.totalorder %s18, 3
      %p148 = pnand %p146, %p147
      %p149 = pneg %p148
      // Predicated region
      $region9: #{tpu_custom_call.1} parent=5 // pred_check
        _
      $region10: #{tpu_custom_call.1} parent=5 // pred_check_branch
        %151 = sbr.rel (%p148) target = $region12
      $region11: #{tpu_custom_call.1} parent=5 // pred_region
        %s152 = ssub.s32 %s18, 1
        // Predicated region
        $region13: #{tpu_custom_call.1} parent=11 // pred_check
          %p153 = pneg %p65
        $region14: #{tpu_custom_call.1} parent=11 // pred_check_branch
          %155 = sbr.rel (%p153) target = $region16
        $region15: #{tpu_custom_call.1} parent=11 // pred_region
          _
        $region16: #{tpu_custom_call.1} parent=11 // pred_fallthru
          _
        // Predicated region
        $region17: #{tpu_custom_call.1} parent=11 // pred_check
          %p156 = pneg %p86
        $region18: #{tpu_custom_call.1} parent=11 // pred_check_branch
          %158 = sbr.rel (%p156) target = $region20
        $region19: #{tpu_custom_call.1} parent=11 // pred_region
          %s160 = ssub.s32 2048, 2048
          %161 = vsyncadd [#allocation3], %s160
          %s162 = sshll.u32 [#allocation2], 4
          %s163 = int_to_ptr.vmem [resolvable:$true] %s162
          %168 = dma.hbm_to_vmem [thread:$0]  %s2, 2048, %s163, [#allocation3], 128, 128, 8
        $region20: #{tpu_custom_call.1} parent=11 // pred_fallthru
          _
      $region12: #{tpu_custom_call.1} parent=5 // pred_fallthru
        _
      %p169 = scmp.lt.s32.totalorder %s18, 2
      // Predicated region
      $region21: #{tpu_custom_call.1} parent=5 // pred_check
        %p170 = pneg %p169
      $region22: #{tpu_custom_call.1} parent=5 // pred_check_branch
        %172 = sbr.rel (%p170) target = $region24
      $region23: #{tpu_custom_call.1} parent=5 // pred_region
        // Predicated region
        $region25: #{tpu_custom_call.1} parent=23 // pred_check
          %p173 = pneg %p38
        $region26: #{tpu_custom_call.1} parent=23 // pred_check_branch
          %175 = sbr.rel (%p173) target = $region28
        $region27: #{tpu_custom_call.1} parent=23 // pred_region
          %p176 = scmp.lt.s32.totalorder %s18, 1
          %s177 = scalar_select %p176, %s18, 1
          %s178 = smul.addr %s177, 4
          %s179 = scalar_lea.vmem %s0, %s178
        $region28: #{tpu_custom_call.1} parent=23 // pred_fallthru
          _
      $region24: #{tpu_custom_call.1} parent=5 // pred_fallthru
        _
      %p180 = scmp.le.s32.totalorder 1, %s18
      %p181 = scmp.lt.s32.totalorder %s18, 3
      %p182 = pnand %p180, %p181
      %p183 = pneg %p182
      // Predicated region
      $region29: #{tpu_custom_call.1} parent=5 // pred_check
        _
      $region30: #{tpu_custom_call.1} parent=5 // pred_check_branch
        %185 = sbr.rel (%p182) target = $region32
      $region31: #{tpu_custom_call.1} parent=5 // pred_region
        %s186 = ssub.s32 %s18, 1
        // Predicated region
        $region33: #{tpu_custom_call.1} parent=31 // pred_check
          %p187 = pneg %p86
        $region34: #{tpu_custom_call.1} parent=31 // pred_check_branch
          %189 = sbr.rel (%p187) target = $region36
        $region35: #{tpu_custom_call.1} parent=31 // pred_region
          %190 = dma.done [#allocation3], 2048
        $region36: #{tpu_custom_call.1} parent=31 // pred_fallthru
          _
        %p191 = scmp.lt.s32.totalorder %s23, 1
        %s192 = scalar_select %p191, %s23, 1
        %s193 = smul.addr %s192, 4
        %s194 = scalar_lea.vmem %s0, %s193
        %p195 = pneg %p44
        %p196 = pneg %p41
        %p197 = pneg %p65
        %p198 = pneg %p62
        %p199 = pneg %p86
        %p200 = pneg %p83
        %p201 = pneg %p112
        %p202 = pneg %p109
        %s203 = sand.u32 %s99, 1
        %s204 = scalar_lea.sflag [#allocation4], %s203
        %s205 = sand.u32 %s99, 1
        %s206 = smul.addr %s205, 4
        %s207 = scalar_lea.vmem [#allocation5], %s206
        %p208 = pneg %p138
        %p209 = pneg %p135
        %s210 = sand.u32 %s125, 1
        %s211 = scalar_lea.sflag [#allocation7], %s210
        %s212 = sand.u32 %s125, 1
        %s213 = smul.addr %s212, 8
        %s214 = scalar_lea.vmem [#allocation6], %s213
        %p215 = scmp.lt.s32.totalorder %s23, 1
        %s216 = scalar_select %p215, %s23, 1
        %s217 = smul.addr %s216, 4
        %s218 = scalar_lea.vmem %s0, %s217
        %v220 = vld [vmem:[%s218] sm:$0xf]
        %v221 = vld [vmem:[%s1] sm:$0xf]
        %vm222 = vcmask 64512
        %v224 = vsel %vm222, %v220, 0
        %vm226 = vcmask 1043456
        %v228 = vsel %vm226, %v221, 0
        %230 = vmatprep.subr.bf16.mxu0 0
        %231 = vmatpush1.bf16.msra.mxu0 %v228
        %232 = vmatprep.subr.bf16.mxu0 0
        %233 = vmatpush1.bf16.msra.mxu0 0
        %234 = vmatprep.subr.bf16.mxu0 0
        %235 = vmatpush1.bf16.msra.mxu0 0
        %236 = vmatprep.subr.bf16.mxu0 0
        %237 = vmatpush1.bf16.msra.mxu0 0
        %238 = vmatprep.subr.bf16.mxu0 0
        %239 = vmatpush1.bf16.msra.mxu0 0
        %240 = vmatprep.subr.bf16.mxu0 0
        %241 = vmatpush1.bf16.msra.mxu0 0
        %242 = vmatprep.subr.bf16.mxu0 0
        %243 = vmatpush1.bf16.msra.mxu0 0
        %244 = vmatprep.subr.bf16.mxu0 0
        %245 = vmatpush1.bf16.msra.mxu0 0
        %246 = vmatprep.subr.bf16.mxu0 0
        %247 = vmatpush1.bf16.msra.mxu0 0
        %248 = vmatprep.subr.bf16.mxu0 0
        %249 = vmatpush1.bf16.msra.mxu0 0
        %250 = vmatprep.subr.bf16.mxu0 0
        %251 = vmatpush1.bf16.msra.mxu0 0
        %252 = vmatprep.subr.bf16.mxu0 0
        %253 = vmatpush1.bf16.msra.mxu0 0
        %254 = vmatprep.subr.bf16.mxu0 0
        %255 = vmatpush1.bf16.msra.mxu0 0
        %256 = vmatprep.subr.bf16.mxu0 0
        %257 = vmatpush1.bf16.msra.mxu0 0
        %258 = vmatprep.subr.bf16.mxu0 0
        %259 = vmatpush1.bf16.msra.mxu0 0
        %260 = vmatprep.subr.bf16.mxu0 0
        %261 = vmatpush1.bf16.msra.mxu0 0
        %262 = vmatprep.mubr.bf16.mxu0 0
        %263 = vmatmul.mubr.bf16.gmra.mrb[0].mxu0 %v224
        %v264 = vpop.f32.mrb[0].mxu0
        %v265 = vadd.f32 0.0, %v264
        %v266 = vpop.f32.mrb[0].mxu0
        %v267 = vpop.f32.mrb[0].mxu0
        %v268 = vpop.f32.mrb[0].mxu0
        %269 = vdwg.mxu0
        %v270 = vpack.c.bf16 %v265, %v265
        %271 = vst [vmem:[%s207] sm:$0xf] %v270
        %v272 = vld [vmem:[#allocation2] sm:$0xff]
        %v273 = vld [vmem:[#allocation2 + $0x8] sm:$0xff]
        %v274 = vld [vmem:[#allocation2 + $0x10] sm:$0xff]
        %v275 = vld [vmem:[#allocation2 + $0x18] sm:$0xff]
        %v276 = vld [vmem:[#allocation2 + $0x20] sm:$0xff]
        %v277 = vld [vmem:[#allocation2 + $0x28] sm:$0xff]
        %v278 = vld [vmem:[#allocation2 + $0x30] sm:$0xff]
        %v279 = vld [vmem:[#allocation2 + $0x38] sm:$0xff]
        %v280 = vld [vmem:[#allocation2 + $0x40] sm:$0xff]
        %v281 = vld [vmem:[#allocation2 + $0x48] sm:$0xff]
        %v282 = vld [vmem:[#allocation2 + $0x50] sm:$0xff]
        %v283 = vld [vmem:[#allocation2 + $0x58] sm:$0xff]
        %v284 = vld [vmem:[#allocation2 + $0x60] sm:$0xff]
        %v285 = vld [vmem:[#allocation2 + $0x68] sm:$0xff]
        %v286 = vld [vmem:[#allocation2 + $0x70] sm:$0xff]
        %v287 = vld [vmem:[#allocation2 + $0x78] sm:$0xff]
        %288 = vmatprep.subr.mxu0 0.0
        %289 = vmatpush1.msra.mxu0 %v272
        %290 = vmatprep.subr.mxu0 0.0
        %291 = vmatpush1.msra.mxu0 %v273
        %292 = vmatprep.subr.mxu0 0.0
        %293 = vmatpush1.msra.mxu0 %v274
        %294 = vmatprep.subr.mxu0 0.0
        %295 = vmatpush1.msra.mxu0 %v275
        %296 = vmatprep.subr.mxu0 0.0
        %297 = vmatpush1.msra.mxu0 %v276
        %298 = vmatprep.subr.mxu0 0.0
        %299 = vmatpush1.msra.mxu0 %v277
        %300 = vmatprep.subr.mxu0 0.0
        %301 = vmatpush1.msra.mxu0 %v278
        %302 = vmatprep.subr.mxu0 0.0
        %303 = vmatpush1.msra.mxu0 %v279
        %304 = vmatprep.subr.mxu0 0.0
        %305 = vmatpush1.msra.mxu0 %v280
        %306 = vmatprep.subr.mxu0 0.0
        %307 = vmatpush1.msra.mxu0 %v281
        %308 = vmatprep.subr.mxu0 0.0
        %309 = vmatpush1.msra.mxu0 %v282
        %310 = vmatprep.subr.mxu0 0.0
        %311 = vmatpush1.msra.mxu0 %v283
        %312 = vmatprep.subr.mxu0 0.0
        %313 = vmatpush1.msra.mxu0 %v284
        %314 = vmatprep.subr.mxu0 0.0
        %315 = vmatpush1.msra.mxu0 %v285
        %316 = vmatprep.subr.mxu0 0.0
        %317 = vmatpush1.msra.mxu0 %v286
        %318 = vmatprep.subr.mxu0 0.0
        %319 = vmatpush1.msra.mxu0 %v287
        %320 = vmatprep.subr.mxu0 0.0
        %321 = vmatpush1.msra.mxu0 0.0
        %322 = vmatprep.subr.mxu0 0.0
        %323 = vmatpush1.msra.mxu0 0.0
        %324 = vmatprep.subr.mxu0 0.0
        %325 = vmatpush1.msra.mxu0 0.0
        %326 = vmatprep.subr.mxu0 0.0
        %327 = vmatpush1.msra.mxu0 0.0
        %328 = vmatprep.subr.mxu0 0.0
        %329 = vmatpush1.msra.mxu0 0.0
        %330 = vmatprep.subr.mxu0 0.0
        %331 = vmatpush1.msra.mxu0 0.0
        %332 = vmatprep.subr.mxu0 0.0
        %333 = vmatpush1.msra.mxu0 0.0
        %334 = vmatprep.subr.mxu0 0.0
        %335 = vmatpush1.msra.mxu0 0.0
        %336 = vmatprep.subr.mxu0 0.0
        %337 = vmatpush1.msra.mxu0 0.0
        %338 = vmatprep.subr.mxu0 0.0
        %339 = vmatpush1.msra.mxu0 0.0
        %340 = vmatprep.subr.mxu0 0.0
        %341 = vmatpush1.msra.mxu0 0.0
        %342 = vmatprep.subr.mxu0 0.0
        %343 = vmatpush1.msra.mxu0 0.0
        %344 = vmatprep.subr.mxu0 0.0
        %345 = vmatpush1.msra.mxu0 0.0
        %346 = vmatprep.subr.mxu0 0.0
        %347 = vmatpush1.msra.mxu0 0.0
        %348 = vmatprep.subr.mxu0 0.0
        %349 = vmatpush1.msra.mxu0 0.0
        %350 = vmatprep.subr.mxu0 0.0
        %351 = vmatpush1.msra.mxu0 0.0
        %352 = vmatprep.mubr.f32.mxu0 0.0
        %353 = vmatmul.mubr.f32.gmra.mrb[0].mxu0 %v265
        %v354 = vpop.f32.mrb[0].mxu0
        %v355 = vadd.f32 0.0, %v354
        %v356 = vpop.f32.mrb[0].mxu0
        %357 = vdwg.mxu0
        %358 = vst [vmem:[%s214] sm:$0xff] %v355
        %s359 = sand.u32 %s99, 1
        %s360 = scalar_lea.sflag [#allocation4], %s359
        %s361 = sand.u32 %s99, 1
        %s362 = smul.addr %s361, 4
        %s363 = scalar_lea.vmem [#allocation5], %s362
        %s364 = sand.u32 %s125, 1
        %s365 = scalar_lea.sflag [#allocation7], %s364
        %s366 = sand.u32 %s125, 1
        %s367 = smul.addr %s366, 8
        %s368 = scalar_lea.vmem [#allocation6], %s367
        // Predicated region
        $region37: #{tpu_custom_call.1} parent=31 // pred_check
          %p369 = pneg %p109
        $region38: #{tpu_custom_call.1} parent=31 // pred_check_branch
          %371 = sbr.rel (%p369) target = $region40
        $region39: #{tpu_custom_call.1} parent=31 // pred_region
          %s373 = ssub.s32 64, 64
          %374 = vsyncadd %s360, %s373
          %s375 = smul.addr %s23, 64
          %s376 = scalar_lea.hbm %s3, %s375
          %s378 = sshll.u32 %s363, 4
          %s379 = int_to_ptr.vmem [resolvable:$true] %s378
          %381 = dma.vmem_to_hbm [thread:$0]  %s379, 64, %s376, %s360
        $region40: #{tpu_custom_call.1} parent=31 // pred_fallthru
          _
        // Predicated region
        $region41: #{tpu_custom_call.1} parent=31 // pred_check
          %p382 = pneg %p135
        $region42: #{tpu_custom_call.1} parent=31 // pred_check_branch
          %384 = sbr.rel (%p382) target = $region44
        $region43: #{tpu_custom_call.1} parent=31 // pred_region
          %s386 = ssub.s32 128, 128
          %387 = vsyncadd %s365, %s386
          %s388 = smul.addr %s23, 128
          %s389 = scalar_lea.hbm %s4, %s388
          %s391 = sshll.u32 %s368, 4
          %s392 = int_to_ptr.vmem [resolvable:$true] %s391
          %394 = dma.vmem_to_hbm [thread:$0]  %s392, 128, %s389, %s365
        $region44: #{tpu_custom_call.1} parent=31 // pred_fallthru
          _
      $region32: #{tpu_custom_call.1} parent=5 // pred_fallthru
        _
      %p395 = scmp.le.s32.totalorder 2, %s18
      // Predicated region
      $region45: #{tpu_custom_call.1} parent=5 // pred_check
        %p396 = pneg %p395
      $region46: #{tpu_custom_call.1} parent=5 // pred_check_branch
        %398 = sbr.rel (%p396) target = $region48
      $region47: #{tpu_custom_call.1} parent=5 // pred_region
        %s399 = ssub.s32 %s18, 2
        // Predicated region
        $region49: #{tpu_custom_call.1} parent=47 // pred_check
          %p400 = pneg %p115
        $region50: #{tpu_custom_call.1} parent=47 // pred_check_branch
          %402 = sbr.rel (%p400) target = $region52
        $region51: #{tpu_custom_call.1} parent=47 // pred_region
          %s403 = sand.u32 %s100, 1
          %s404 = scalar_lea.sflag [#allocation4], %s403
          %s405 = sand.u32 %s100, 1
          %s406 = smul.addr %s405, 4
          %s407 = scalar_lea.vmem [#allocation5], %s406
          %408 = dma.done %s404, 64
        $region52: #{tpu_custom_call.1} parent=47 // pred_fallthru
          _
        // Predicated region
        $region53: #{tpu_custom_call.1} parent=47 // pred_check
          %p409 = pneg %p141
        $region54: #{tpu_custom_call.1} parent=47 // pred_check_branch
          %411 = sbr.rel (%p409) target = $region56
        $region55: #{tpu_custom_call.1} parent=47 // pred_region
          %s412 = sand.u32 %s126, 1
          %s413 = scalar_lea.sflag [#allocation7], %s412
          %s414 = sand.u32 %s126, 1
          %s415 = smul.addr %s414, 8
          %s416 = scalar_lea.vmem [#allocation6], %s415
          %417 = dma.done %s413, 128
        $region56: #{tpu_custom_call.1} parent=47 // pred_fallthru
          _
      $region48: #{tpu_custom_call.1} parent=5 // pred_fallthru
        _
    $region6: #{tpu_custom_call.1} parent=1 // loop_footer
      %s22 = sadd.s32 1, %s18
    $region7: #{tpu_custom_call.1} parent=1 // loop_footer_branch
      %17 = sbr.rel target = $region3
    $region8: #{tpu_custom_call.1} parent=1 // loop_exit
      _
    %418 = vsyncpa [#allocation3], 1
    %s419 = scalar_lea.sflag [#allocation3], 1
    %420 = vsyncpa %s419, 1
    %421 = vsyncpa [#allocation4], 1
    %s422 = scalar_lea.sflag [#allocation4], 1
    %423 = vsyncpa %s422, 1
    %424 = vsyncpa [#allocation7], 1
    %s425 = scalar_lea.sflag [#allocation7], 1
    %426 = vsyncpa %s425, 1

</llo_original>
